<compile_context>
chip_gen: v6e
topology: v6e:2x2x1
jax: 0.10.0
libtpu: 0.0.40
codegen_flags: <defaults>
</compile_context>

<pallas_src>
import functools

import jax
import jax.numpy as jnp
from jax.experimental import pallas as pl
from jax.experimental.pallas import tpu as pltpu

D_IN, D_H, D_OUT = 200, 100, 50        # logical dims (PyTorch module)
D_H_P, D_OUT_P = 128, 128              # lane-padded feature dims (lane = 128)


def _mlp_kernel(x_ref, w1_ref, b1_ref, w2_ref, b2_ref, w3_ref, b3_ref, o_ref):
    # fc1 + ReLU  (bf16 MXU inputs, f32 accumulation).  x is cast to bf16 here
    # (VPU work hidden under the DMA) instead of in a separate wrapper pass.
    x = x_ref[...].astype(jnp.bfloat16)
    h = jnp.dot(x, w1_ref[...], preferred_element_type=jnp.float32) + b1_ref[...]
    h = jnp.maximum(h, 0.0)
    # fc2 + ReLU
    h = jnp.dot(h.astype(w2_ref.dtype), w2_ref[...],
                preferred_element_type=jnp.float32) + b2_ref[...]
    h = jnp.maximum(h, 0.0)
    # fc3 (no activation)
    o = jnp.dot(h.astype(w3_ref.dtype), w3_ref[...],
                preferred_element_type=jnp.float32) + b3_ref[...]
    o_ref[...] = o.astype(o_ref.dtype)


def _round_up(n, m):
    return ((n + m - 1) // m) * m


def _pad2(a, shape):
    """Zero-pad a 2-D array up to `shape`."""
    return jnp.zeros(shape, a.dtype).at[: a.shape[0], : a.shape[1]].set(a)


def prepare_params(w1, b1, w2, b2, w3, b3):
    """One-time parameter prep (padding + bf16 cast), hoisted out of the
    per-call path.

    w* : (in, out) float32 (transposed vs. nn.Linear's (out, in) layout)
    b* : (out,)    float32
    """
    w1p = _pad2(jnp.asarray(w1, jnp.float32), (D_IN, D_H_P)).astype(jnp.bfloat16)
    w2p = _pad2(jnp.asarray(w2, jnp.float32), (D_H_P, D_H_P)).astype(jnp.bfloat16)
    w3p = _pad2(jnp.asarray(w3, jnp.float32), (D_H_P, D_OUT_P)).astype(jnp.bfloat16)
    b1p = _pad2(jnp.asarray(b1, jnp.float32).reshape(1, -1), (1, D_H_P))
    b2p = _pad2(jnp.asarray(b2, jnp.float32).reshape(1, -1), (1, D_H_P))
    b3p = _pad2(jnp.asarray(b3, jnp.float32).reshape(1, -1), (1, D_OUT_P))
    return w1p, b1p, w2p, b2p, w3p, b3p


@functools.partial(jax.jit, static_argnames=("block_m",))
def net_forward(x, w1p, b1p, w2p, b2p, w3p, b3p, *, block_m=512):
    """Forward pass of `Net`.

    x : (B, 200) float32 (unpadded).
    Padded params from prepare_params().
    Returns the padded (B_pad, 128) float32 output; valid data is [:B, :50].
    """
    B = x.shape[0]

    # Batch tile: default 512 (fills the 256-row MXU on v6e/v7x), clamped for
    # small B, and capped so the grid has >= 2 steps when possible so v7x can
    # use both TensorCores.
    B8 = _round_up(max(B, 1), 8)
    bm = min(block_m, _round_up(pl.cdiv(B8, 2), 8))
    bm = max(bm, 8)
    B_pad = _round_up(B, bm)

    xp = x.astype(jnp.float32)
    if B_pad != B:
        xp = jnp.pad(xp, ((0, B_pad - B), (0, 0)))   # batch pad only; K stays 200

    grid = (B_pad // bm,)

    flops = 2 * B_pad * (D_IN * D_H_P + D_H_P * D_H_P + D_H_P * D_OUT_P)
    bytes_accessed = (
        B_pad * D_IN * 4                                   # x (f32)
        + (D_IN * D_H_P + D_H_P * D_H_P + D_H_P * D_OUT_P) * 2   # weights (bf16)
        + (2 * D_H_P + D_OUT_P) * 4                        # biases (f32)
        + B_pad * D_OUT_P * 4                              # out (f32)
    )

    out = pl.pallas_call(
        _mlp_kernel,
        out_shape=jax.ShapeDtypeStruct((B_pad, D_OUT_P), jnp.float32),
        grid_spec=pltpu.PrefetchScalarGridSpec(
            num_scalar_prefetch=0,
            grid=grid,
            in_specs=[
                pl.BlockSpec((bm, D_IN), lambda i: (i, 0)),          # x tile (K=200, full extent)
                pl.BlockSpec((D_IN, D_H_P), lambda i: (0, 0)),       # w1 (200x128)
                pl.BlockSpec((1, D_H_P), lambda i: (0, 0)),          # b1
                pl.BlockSpec((D_H_P, D_H_P), lambda i: (0, 0)),      # w2
                pl.BlockSpec((1, D_H_P), lambda i: (0, 0)),          # b2
                pl.BlockSpec((D_H_P, D_OUT_P), lambda i: (0, 0)),    # w3
                pl.BlockSpec((1, D_OUT_P), lambda i: (0, 0)),        # b3
            ],
            out_specs=pl.BlockSpec((bm, D_OUT_P), lambda i: (i, 0)),
        ),
        compiler_params=pltpu.CompilerParams(
            dimension_semantics=("parallel",)),
        cost_estimate=pl.CostEstimate(
            flops=flops, transcendentals=0, bytes_accessed=bytes_accessed),
    )(xp, w1p, b1p, w2p, b2p, w3p, b3p)

    return out


if __name__ == "__main__":
    key = jax.random.PRNGKey(0)
    kx, k1, kb1, k2, kb2, k3, kb3 = jax.random.split(key, 7)

    B = 8  # small demo batch; the kernel scales bm up automatically for big B
    x = jax.random.normal(kx, (B, D_IN), dtype=jnp.float32)
    w1 = jax.random.normal(k1, (D_IN, D_H), dtype=jnp.float32) * 0.05
    b1 = jax.random.normal(kb1, (D_H,), dtype=jnp.float32) * 0.05
    w2 = jax.random.normal(k2, (D_H, D_H), dtype=jnp.float32) * 0.05
    b2 = jax.random.normal(kb2, (D_H,), dtype=jnp.float32) * 0.05
    w3 = jax.random.normal(k3, (D_H, D_OUT), dtype=jnp.float32) * 0.05
    b3 = jax.random.normal(kb3, (D_OUT,), dtype=jnp.float32) * 0.05

    # One-time parameter prep (outside the per-call path).
    params = prepare_params(w1, b1, w2, b2, w3, b3)

    out_padded = net_forward(x, *params)
    out_padded = jax.block_until_ready(out_padded)
    out = out_padded[:B, :D_OUT]   # consumer-side slice of the padded buffer

    # Pure-JAX f32 reference (kernel uses bf16 MXU inputs + f32 accumulation,
    # so compare with a loose tolerance).
    h = jnp.maximum(x @ w1 + b1, 0.0)
    h = jnp.maximum(h @ w2 + b2, 0.0)
    ref = h @ w3 + b3

    assert out.shape == (B, D_OUT) and out.dtype == jnp.float32
    assert bool(jnp.all(jnp.isfinite(out)))
    max_err = float(jnp.max(jnp.abs(out - ref)))
    assert max_err < 5e-2, f"max abs err vs f32 reference: {max_err}"
    print("KERNEL_OK")
</pallas_src>

<mosaic_0001>
module attributes {stable_mosaic.version = 11 : i64} {
  func.func @_mlp_kernel(%arg0: i32, %arg1: memref<8x200xf32, #tpu.memory_space<vmem>>, %arg2: memref<200x128xbf16, #tpu.memory_space<vmem>>, %arg3: memref<1x128xf32, #tpu.memory_space<vmem>>, %arg4: memref<128x128xbf16, #tpu.memory_space<vmem>>, %arg5: memref<1x128xf32, #tpu.memory_space<vmem>>, %arg6: memref<128x128xbf16, #tpu.memory_space<vmem>>, %arg7: memref<1x128xf32, #tpu.memory_space<vmem>>, %arg8: memref<8x128xf32, #tpu.memory_space<vmem>>) attributes {dimension_semantics = [#tpu.dimension_semantics<parallel>], iteration_bounds = array<i64: 1>, scalar_prefetch = 0 : i64, scratch_operands = 0 : i64, tpu.core_type = #tpu.core_type<tc>, window_params = [{transform_indices = @transform_0, window_bounds = array<i64: 8, 200>}, {pipeline_mode = #tpu.pipeline_mode<synchronous>, transform_indices = @transform_1, window_bounds = array<i64: 200, 128>}, {pipeline_mode = #tpu.pipeline_mode<synchronous>, transform_indices = @transform_2, window_bounds = array<i64: 1, 128>}, {pipeline_mode = #tpu.pipeline_mode<synchronous>, transform_indices = @transform_3, window_bounds = array<i64: 128, 128>}, {pipeline_mode = #tpu.pipeline_mode<synchronous>, transform_indices = @transform_4, window_bounds = array<i64: 1, 128>}, {pipeline_mode = #tpu.pipeline_mode<synchronous>, transform_indices = @transform_5, window_bounds = array<i64: 128, 128>}, {pipeline_mode = #tpu.pipeline_mode<synchronous>, transform_indices = @transform_6, window_bounds = array<i64: 1, 128>}, {transform_indices = @transform_7, window_bounds = array<i64: 8, 128>}]} {
    %c0 = arith.constant 0 : index
    %c0_0 = arith.constant 0 : index
    %0 = vector.load %arg1[%c0, %c0_0] : memref<8x200xf32, #tpu.memory_space<vmem>>, vector<8x200xf32>
    %1 = arith.truncf %0 : vector<8x200xf32> to vector<8x200xbf16>
    %c0_1 = arith.constant 0 : index
    %c0_2 = arith.constant 0 : index
    %2 = vector.load %arg2[%c0_1, %c0_2] : memref<200x128xbf16, #tpu.memory_space<vmem>>, vector<200x128xbf16>
    %cst = arith.constant dense<0.000000e+00> : vector<8x128xf32>
    %3 = tpu.matmul %1, %2, %cst {dimension_numbers = #tpu.dot_dimension_numbers<[1], [0], [0], [1], [0, 0, 1, 1], [], []>} : vector<8x200xbf16>, vector<200x128xbf16>, vector<8x128xf32> -> vector<8x128xf32>
    %c0_3 = arith.constant 0 : index
    %c0_4 = arith.constant 0 : index
    %4 = vector.load %arg3[%c0_3, %c0_4] : memref<1x128xf32, #tpu.memory_space<vmem>>, vector<1x128xf32>
    %5 = vector.broadcast %4 : vector<1x128xf32> to vector<8x128xf32>
    %6 = arith.addf %3, %5 : vector<8x128xf32>
    %cst_5 = arith.constant 0.000000e+00 : f32
    %7 = vector.broadcast %cst_5 : f32 to vector<8x128xf32>
    %8 = arith.maximumf %6, %7 : vector<8x128xf32>
    %9 = arith.truncf %8 : vector<8x128xf32> to vector<8x128xbf16>
    %c0_6 = arith.constant 0 : index
    %c0_7 = arith.constant 0 : index
    %10 = vector.load %arg4[%c0_6, %c0_7] : memref<128x128xbf16, #tpu.memory_space<vmem>>, vector<128x128xbf16>
    %cst_8 = arith.constant dense<0.000000e+00> : vector<8x128xf32>
    %11 = tpu.matmul %9, %10, %cst_8 {dimension_numbers = #tpu.dot_dimension_numbers<[1], [0], [0], [1], [0, 0, 1, 1], [], []>} : vector<8x128xbf16>, vector<128x128xbf16>, vector<8x128xf32> -> vector<8x128xf32>
    %c0_9 = arith.constant 0 : index
    %c0_10 = arith.constant 0 : index
    %12 = vector.load %arg5[%c0_9, %c0_10] : memref<1x128xf32, #tpu.memory_space<vmem>>, vector<1x128xf32>
    %13 = vector.broadcast %12 : vector<1x128xf32> to vector<8x128xf32>
    %14 = arith.addf %11, %13 : vector<8x128xf32>
    %cst_11 = arith.constant 0.000000e+00 : f32
    %15 = vector.broadcast %cst_11 : f32 to vector<8x128xf32>
    %16 = arith.maximumf %14, %15 : vector<8x128xf32>
    %17 = arith.truncf %16 : vector<8x128xf32> to vector<8x128xbf16>
    %c0_12 = arith.constant 0 : index
    %c0_13 = arith.constant 0 : index
    %18 = vector.load %arg6[%c0_12, %c0_13] : memref<128x128xbf16, #tpu.memory_space<vmem>>, vector<128x128xbf16>
    %cst_14 = arith.constant dense<0.000000e+00> : vector<8x128xf32>
    %19 = tpu.matmul %17, %18, %cst_14 {dimension_numbers = #tpu.dot_dimension_numbers<[1], [0], [0], [1], [0, 0, 1, 1], [], []>} : vector<8x128xbf16>, vector<128x128xbf16>, vector<8x128xf32> -> vector<8x128xf32>
    %c0_15 = arith.constant 0 : index
    %c0_16 = arith.constant 0 : index
    %20 = vector.load %arg7[%c0_15, %c0_16] : memref<1x128xf32, #tpu.memory_space<vmem>>, vector<1x128xf32>
    %21 = vector.broadcast %20 : vector<1x128xf32> to vector<8x128xf32>
    %22 = arith.addf %19, %21 : vector<8x128xf32>
    %c0_17 = arith.constant 0 : index
    %c0_18 = arith.constant 0 : index
    %23 = vector.load %arg8[%c0_17, %c0_18] : memref<8x128xf32, #tpu.memory_space<vmem>>, vector<8x128xf32>
    tpu.vector_store %arg8[%c0_17, %c0_18], %22 {strides = array<i32>} : memref<8x128xf32, #tpu.memory_space<vmem>>, vector<8x128xf32>,
    return
  }
  func.func @transform_0(%arg0: i32) -> (i32, i32) {
    %c0_i32 = arith.constant 0 : i32
    %c0_i32_0 = arith.constant 0 : i32
    return %arg0, %c0_i32 : i32, i32
  }
  func.func @transform_1(%arg0: i32) -> (i32, i32) {
    %c0_i32 = arith.constant 0 : i32
    %c0_i32_0 = arith.constant 0 : i32
    %c0_i32_1 = arith.constant 0 : i32
    return %c0_i32, %c0_i32_0 : i32, i32
  }
  func.func @transform_2(%arg0: i32) -> (i32, i32) {
    %c0_i32 = arith.constant 0 : i32
    %c0_i32_0 = arith.constant 0 : i32
    %c0_i32_1 = arith.constant 0 : i32
    return %c0_i32, %c0_i32_0 : i32, i32
  }
  func.func @transform_3(%arg0: i32) -> (i32, i32) {
    %c0_i32 = arith.constant 0 : i32
    %c0_i32_0 = arith.constant 0 : i32
    %c0_i32_1 = arith.constant 0 : i32
    return %c0_i32, %c0_i32_0 : i32, i32
  }
  func.func @transform_4(%arg0: i32) -> (i32, i32) {
    %c0_i32 = arith.constant 0 : i32
    %c0_i32_0 = arith.constant 0 : i32
    %c0_i32_1 = arith.constant 0 : i32
    return %c0_i32, %c0_i32_0 : i32, i32
  }
  func.func @transform_5(%arg0: i32) -> (i32, i32) {
    %c0_i32 = arith.constant 0 : i32
    %c0_i32_0 = arith.constant 0 : i32
    %c0_i32_1 = arith.constant 0 : i32
    return %c0_i32, %c0_i32_0 : i32, i32
  }
  func.func @transform_6(%arg0: i32) -> (i32, i32) {
    %c0_i32 = arith.constant 0 : i32
    %c0_i32_0 = arith.constant 0 : i32
    %c0_i32_1 = arith.constant 0 : i32
    return %c0_i32, %c0_i32_0 : i32, i32
  }
  func.func @transform_7(%arg0: i32) -> (i32, i32) {
    %c0_i32 = arith.constant 0 : i32
    %c0_i32_0 = arith.constant 0 : i32
    return %arg0, %c0_i32 : i32, i32
  }
}

</mosaic_0001>

<llo_original>
// kernel: net_forward.1
$region0: #{net_forward.1}
  #allocation0 [shape = 'u32[]', space=smem, size = 0x4, offset = 0x4, fixed_abs, tag = 'smem constant byte address 0x4 - core index']
  #allocation1 [shape = 'u32[144,128]{1,0:T(1,128)}', space=vmem, size = 0x12000, scoped, tag = 'internal scratch']
  %s0 = inlined_call_operand.hbm [shape: f32[8,200], index: 0, kind: input, shape index: {}]
  %s1 = inlined_call_operand.hbm [shape: bf16[200,128], index: 1, kind: input, shape index: {}]
  %s2 = inlined_call_operand.vmem [shape: f32[1,128], index: 2, kind: input, shape index: {}]
  %s3 = inlined_call_operand.hbm [shape: bf16[128,128], index: 3, kind: input, shape index: {}]
  %s4 = inlined_call_operand.vmem [shape: f32[1,128], index: 4, kind: input, shape index: {}]
  %s5 = inlined_call_operand.hbm [shape: bf16[128,128], index: 5, kind: input, shape index: {}]
  %s6 = inlined_call_operand.vmem [shape: f32[1,128], index: 6, kind: input, shape index: {}]
  %s7 = inlined_call_operand.hbm [shape: f32[8,128], index: 7, kind: output, shape index: {}]
  %s8 = sld [smem:[#allocation0]]
  $region54: #{net_forward.1} parent=0
    _
  %s10 = ssub.s32 1, %s8
  %s11 = scalar_select 0, %s10, %s8
  $region1: #{net_forward.1} parent=0
    #allocation2 [shape = 'u8[8192]{0}', space=vmem, size = 0x2000, scoped, tag = 'input window, operand 0, single buffered']
    #allocation3 [shape = 's32[1]{0}', space=sflag, size = 0x4, scoped, tag = 'scoped memory for net_forward.1']
    #allocation4 [shape = 's32[1]{0}', space=sflag, size = 0x4, scoped, tag = 'scoped memory for net_forward.1']
    #allocation5 [shape = 'u8[51200]{0}', space=vmem, size = 0xc800, scoped, tag = 'input window, operand 1, single buffered']
    #allocation6 [shape = 's32[1]{0}', space=sflag, size = 0x4, scoped, tag = 'scoped memory for net_forward.1']
    #allocation7 [shape = 'u8[32768]{0}', space=vmem, size = 0x8000, scoped, tag = 'input window, operand 3, single buffered']
    #allocation8 [shape = 'u8[32768]{0}', space=vmem, size = 0x8000, scoped, tag = 'input window, operand 5, single buffered']
    #allocation9 [shape = 's32[1]{0}', space=sflag, size = 0x4, scoped, tag = 'scoped memory for net_forward.1']
    #allocation10 [shape = 'u8[4096]{0}', space=vmem, size = 0x1000, scoped, tag = 'output window, operand 0, single buffered']
    %12 = vsyncpa [#allocation3], 0
    %13 = vsyncpa [#allocation6], 0
    %14 = vsyncpa [#allocation9], 0
    %15 = vsyncpa [#allocation4], 0
    // Predicated region
    $region2: #{net_forward.1} parent=1 // pred_check
      _
    $region3: #{net_forward.1} parent=1 // pred_check_branch
      %17 = sbr.rel (0) target = $region5
    $region4: #{net_forward.1} parent=1 // pred_region
      %s19 = ssub.s32 256, 256
      %20 = vsyncadd [#allocation3], %s19
      %s22 = sshll.u32 [#allocation2], 4
      %s23 = int_to_ptr.vmem [resolvable:$true] %s22
      %25 = dma.hbm_to_vmem [thread:$0]  %s0, 256, %s23, [#allocation3]
    $region5: #{net_forward.1} parent=1 // pred_fallthru
      _
    // Predicated region
    $region6: #{net_forward.1} parent=1 // pred_check
      _
    $region7: #{net_forward.1} parent=1 // pred_check_branch
      %27 = sbr.rel (0) target = $region9
    $region8: #{net_forward.1} parent=1 // pred_region
      %s29 = ssub.s32 1600, 1600
      %30 = vsyncadd [#allocation6], %s29
      %s31 = sshll.u32 [#allocation5], 4
      %s32 = int_to_ptr.vmem [resolvable:$true] %s31
      %37 = dma.hbm_to_vmem [thread:$0]  %s1, 1600, %s32, [#allocation6], 64, 64, 4
    $region9: #{net_forward.1} parent=1 // pred_fallthru
      _
    // Predicated region
    $region10: #{net_forward.1} parent=1 // pred_check
      _
    $region11: #{net_forward.1} parent=1 // pred_check_branch
      %39 = sbr.rel (0) target = $region13
    $region12: #{net_forward.1} parent=1 // pred_region
      _
    $region13: #{net_forward.1} parent=1 // pred_fallthru
      _
    // Predicated region
    $region14: #{net_forward.1} parent=1 // pred_check
      _
    $region15: #{net_forward.1} parent=1 // pred_check_branch
      %41 = sbr.rel (0) target = $region17
    $region16: #{net_forward.1} parent=1 // pred_region
      %s43 = ssub.s32 1024, 1024
      %44 = vsyncadd [#allocation6], %s43
      %s45 = sshll.u32 [#allocation7], 4
      %s46 = int_to_ptr.vmem [resolvable:$true] %s45
      %51 = dma.hbm_to_vmem [thread:$0]  %s3, 1024, %s46, [#allocation6], 64, 64, 4
    $region17: #{net_forward.1} parent=1 // pred_fallthru
      _
    // Predicated region
    $region18: #{net_forward.1} parent=1 // pred_check
      _
    $region19: #{net_forward.1} parent=1 // pred_check_branch
      %53 = sbr.rel (0) target = $region21
    $region20: #{net_forward.1} parent=1 // pred_region
      _
    $region21: #{net_forward.1} parent=1 // pred_fallthru
      _
    // Predicated region
    $region22: #{net_forward.1} parent=1 // pred_check
      _
    $region23: #{net_forward.1} parent=1 // pred_check_branch
      %55 = sbr.rel (0) target = $region25
    $region24: #{net_forward.1} parent=1 // pred_region
      %s57 = ssub.s32 1024, 1024
      %58 = vsyncadd [#allocation9], %s57
      %s59 = sshll.u32 [#allocation8], 4
      %s60 = int_to_ptr.vmem [resolvable:$true] %s59
      %65 = dma.hbm_to_vmem [thread:$0]  %s5, 1024, %s60, [#allocation9], 64, 64, 4
    $region25: #{net_forward.1} parent=1 // pred_fallthru
      _
    // Predicated region
    $region26: #{net_forward.1} parent=1 // pred_check
      _
    $region27: #{net_forward.1} parent=1 // pred_check_branch
      %67 = sbr.rel (0) target = $region29
    $region28: #{net_forward.1} parent=1 // pred_region
      _
    $region29: #{net_forward.1} parent=1 // pred_fallthru
      _
    // Predicated region
    $region30: #{net_forward.1} parent=1 // pred_check
      _
    $region31: #{net_forward.1} parent=1 // pred_check_branch
      %69 = sbr.rel (0) target = $region33
    $region32: #{net_forward.1} parent=1 // pred_region
      %70 = dma.done [#allocation3], 256
    $region33: #{net_forward.1} parent=1 // pred_fallthru
      _
    // Predicated region
    $region34: #{net_forward.1} parent=1 // pred_check
      _
    $region35: #{net_forward.1} parent=1 // pred_check_branch
      %72 = sbr.rel (0) target = $region37
    $region36: #{net_forward.1} parent=1 // pred_region
      %73 = dma.done [#allocation6], 1600
    $region37: #{net_forward.1} parent=1 // pred_fallthru
      _
    // Predicated region
    $region38: #{net_forward.1} parent=1 // pred_check
      _
    $region39: #{net_forward.1} parent=1 // pred_check_branch
      %75 = sbr.rel (0) target = $region41
    $region40: #{net_forward.1} parent=1 // pred_region
      %76 = dma.done [#allocation6], 1024
    $region41: #{net_forward.1} parent=1 // pred_fallthru
      _
    // Predicated region
    $region42: #{net_forward.1} parent=1 // pred_check
      _
    $region43: #{net_forward.1} parent=1 // pred_check_branch
      %78 = sbr.rel (0) target = $region45
    $region44: #{net_forward.1} parent=1 // pred_region
      %79 = dma.done [#allocation9], 1024
    $region45: #{net_forward.1} parent=1 // pred_fallthru
      _
    %v81 = vld [vmem:[#allocation2] sm:$0xff]
    %v82 = vld [vmem:[#allocation2 + $0x8] sm:$0xff]
    %v83 = vpack.c.bf16 %v81, %v81
    %v84 = vpack.c.bf16 %v82, %v82
    %v85 = vld [vmem:[#allocation5] sm:$0xf]
    %v86 = vld [vmem:[#allocation5 + $0x4] sm:$0xf]
    %v87 = vld [vmem:[#allocation5 + $0x8] sm:$0xf]
    %v88 = vld [vmem:[#allocation5 + $0xc] sm:$0xf]
    %v89 = vld [vmem:[#allocation5 + $0x10] sm:$0xf]
    %v90 = vld [vmem:[#allocation5 + $0x14] sm:$0xf]
    %v91 = vld [vmem:[#allocation5 + $0x18] sm:$0xf]
    %v92 = vld [vmem:[#allocation5 + $0x1c] sm:$0xf]
    %v93 = vld [vmem:[#allocation5 + $0x20] sm:$0xf]
    %v94 = vld [vmem:[#allocation5 + $0x24] sm:$0xf]
    %v95 = vld [vmem:[#allocation5 + $0x28] sm:$0xf]
    %v96 = vld [vmem:[#allocation5 + $0x2c] sm:$0xf]
    %v97 = vld [vmem:[#allocation5 + $0x30] sm:$0xf]
    %v98 = vld [vmem:[#allocation5 + $0x34] sm:$0xf]
    %v99 = vld [vmem:[#allocation5 + $0x38] sm:$0xf]
    %v100 = vld [vmem:[#allocation5 + $0x3c] sm:$0xf]
    %v101 = vld [vmem:[#allocation5 + $0x40] sm:$0xf]
    %v102 = vld [vmem:[#allocation5 + $0x44] sm:$0xf]
    %v103 = vld [vmem:[#allocation5 + $0x48] sm:$0xf]
    %v104 = vld [vmem:[#allocation5 + $0x4c] sm:$0xf]
    %v105 = vld [vmem:[#allocation5 + $0x50] sm:$0xf]
    %v106 = vld [vmem:[#allocation5 + $0x54] sm:$0xf]
    %v107 = vld [vmem:[#allocation5 + $0x58] sm:$0xf]
    %v108 = vld [vmem:[#allocation5 + $0x5c] sm:$0xf]
    %v109 = vld [vmem:[#allocation5 + $0x60] sm:$0xf]
    %v110 = vld [vmem:[%s2] sm:$0x1]
    %v112 = vlaneseq
    %v113 = vshrl.u32 %v112, 7
    %v114 = vsub.s32 0, %v113
    %v115 = vrot.slane %v110, %v114
    %v142 = vunpack.c.l.b16 %v85
    %v143 = vunpack.c.l.b16 %v86
    %v144 = vunpack.c.l.b16 %v87
    %v145 = vunpack.c.l.b16 %v88
    %v146 = vunpack.c.l.b16 %v89
    %v147 = vunpack.c.l.b16 %v90
    %v148 = vunpack.c.l.b16 %v91
    %v149 = vunpack.c.l.b16 %v92
    %v150 = vunpack.c.l.b16 %v93
    %v151 = vunpack.c.l.b16 %v94
    %v152 = vunpack.c.l.b16 %v95
    %v153 = vunpack.c.l.b16 %v96
    %v154 = vunpack.c.l.b16 %v97
    %v155 = vunpack.c.l.b16 %v98
    %v156 = vunpack.c.l.b16 %v99
    %v157 = vunpack.c.l.b16 %v100
    %v158 = vunpack.c.l.b16 %v101
    %v159 = vunpack.c.l.b16 %v102
    %v160 = vunpack.c.l.b16 %v103
    %v161 = vunpack.c.l.b16 %v104
    %v162 = vunpack.c.l.b16 %v105
    %v163 = vunpack.c.l.b16 %v106
    %v164 = vunpack.c.l.b16 %v107
    %v165 = vunpack.c.l.b16 %v108
    %v166 = vunpack.c.l.b16 %v109
    %v167 = vpack.c.b16 %v143, %v142
    %v168 = vpack.c.b16 %v145, %v144
    %v169 = vpack.c.b16 %v147, %v146
    %v170 = vpack.c.b16 %v149, %v148
    %v171 = vpack.c.b16 %v151, %v150
    %v172 = vpack.c.b16 %v153, %v152
    %v173 = vpack.c.b16 %v155, %v154
    %v174 = vpack.c.b16 %v157, %v156
    %v175 = vpack.c.b16 %v159, %v158
    %v176 = vpack.c.b16 %v161, %v160
    %v177 = vpack.c.b16 %v163, %v162
    %v178 = vpack.c.b16 %v165, %v164
    %v179 = vpack.c.b16 %v166, %v166
    %vm192 = vcmask 588800
    %v194 = vsel %vm192, %v84, 0
    %vm196 = vcmask 1043456
    %v198 = vsel %vm196, %v179, 0
    %200 = vmatprep.subr.bf16.mxu0 0
    %201 = vmatpush1.bf16.msra.mxu0 %v174
    %202 = vmatprep.subr.bf16.mxu0 0
    %203 = vmatpush1.bf16.msra.mxu0 %v173
    %204 = vmatprep.subr.bf16.mxu0 0
    %205 = vmatpush1.bf16.msra.mxu0 %v172
    %206 = vmatprep.subr.bf16.mxu0 0
    %207 = vmatpush1.bf16.msra.mxu0 %v171
    %208 = vmatprep.subr.bf16.mxu0 0
    %209 = vmatpush1.bf16.msra.mxu0 %v170
    %210 = vmatprep.subr.bf16.mxu0 0
    %211 = vmatpush1.bf16.msra.mxu0 %v169
    %212 = vmatprep.subr.bf16.mxu0 0
    %213 = vmatpush1.bf16.msra.mxu0 %v168
    %214 = vmatprep.subr.bf16.mxu0 0
    %215 = vmatpush1.bf16.msra.mxu0 %v167
    %216 = vmatprep.subr.bf16.mxu0 0
    %217 = vmatpush2.bf16.msra.mxu0 0
    %218 = vmatprep.subr.bf16.mxu0 0
    %219 = vmatpush2.bf16.msra.mxu0 0
    %220 = vmatprep.subr.bf16.mxu0 0
    %221 = vmatpush2.bf16.msra.mxu0 0
    %222 = vmatprep.subr.bf16.mxu0 0
    %223 = vmatpush2.bf16.msra.mxu0 %v198
    %224 = vmatprep.subr.bf16.mxu0 0
    %225 = vmatpush2.bf16.msra.mxu0 %v178
    %226 = vmatprep.subr.bf16.mxu0 0
    %227 = vmatpush2.bf16.msra.mxu0 %v177
    %228 = vmatprep.subr.bf16.mxu0 0
    %229 = vmatpush2.bf16.msra.mxu0 %v176
    %230 = vmatprep.subr.bf16.mxu0 0
    %231 = vmatpush2.bf16.msra.mxu0 %v175
    %232 = vmatprep.mubr.bf16.mxu0 %v194
    %233 = vmatmul.mubr.bf16.gmra.mxu0 %v83
    %v234 = vpop.f32.mrf.mxu0
    %v235 = vadd.f32 %v115, %v234
    %v236 = vpop.f32.mrf.mxu0
    %v237 = vpop.f32.mrf.mxu0
    %v238 = vpop.f32.mrf.mxu0
    %239 = vdwg.mxu0
    %v240 = vmax.f32 %v235, 0.0
    %v241 = vpack.c.bf16 %v240, %v240
    %v242 = vld [vmem:[#allocation7] sm:$0xf]
    %v243 = vld [vmem:[#allocation7 + $0x4] sm:$0xf]
    %v244 = vld [vmem:[#allocation7 + $0x8] sm:$0xf]
    %v245 = vld [vmem:[#allocation7 + $0xc] sm:$0xf]
    %v246 = vld [vmem:[#allocation7 + $0x10] sm:$0xf]
    %v247 = vld [vmem:[#allocation7 + $0x14] sm:$0xf]
    %v248 = vld [vmem:[#allocation7 + $0x18] sm:$0xf]
    %v249 = vld [vmem:[#allocation7 + $0x1c] sm:$0xf]
    %v250 = vld [vmem:[#allocation7 + $0x20] sm:$0xf]
    %v251 = vld [vmem:[#allocation7 + $0x24] sm:$0xf]
    %v252 = vld [vmem:[#allocation7 + $0x28] sm:$0xf]
    %v253 = vld [vmem:[#allocation7 + $0x2c] sm:$0xf]
    %v254 = vld [vmem:[#allocation7 + $0x30] sm:$0xf]
    %v255 = vld [vmem:[#allocation7 + $0x34] sm:$0xf]
    %v256 = vld [vmem:[#allocation7 + $0x38] sm:$0xf]
    %v257 = vld [vmem:[#allocation7 + $0x3c] sm:$0xf]
    %v258 = vld [vmem:[%s4] sm:$0x1]
    %v260 = vlaneseq
    %v261 = vshrl.u32 %v260, 7
    %v262 = vsub.s32 0, %v261
    %v263 = vrot.slane %v258, %v262
    %v281 = vunpack.c.l.b16 %v242
    %v282 = vunpack.c.l.b16 %v243
    %v283 = vunpack.c.l.b16 %v244
    %v284 = vunpack.c.l.b16 %v245
    %v285 = vunpack.c.l.b16 %v246
    %v286 = vunpack.c.l.b16 %v247
    %v287 = vunpack.c.l.b16 %v248
    %v288 = vunpack.c.l.b16 %v249
    %v289 = vunpack.c.l.b16 %v250
    %v290 = vunpack.c.l.b16 %v251
    %v291 = vunpack.c.l.b16 %v252
    %v292 = vunpack.c.l.b16 %v253
    %v293 = vunpack.c.l.b16 %v254
    %v294 = vunpack.c.l.b16 %v255
    %v295 = vunpack.c.l.b16 %v256
    %v296 = vunpack.c.l.b16 %v257
    %v297 = vpack.c.b16 %v282, %v281
    %v298 = vpack.c.b16 %v284, %v283
    %v299 = vpack.c.b16 %v286, %v285
    %v300 = vpack.c.b16 %v288, %v287
    %v301 = vpack.c.b16 %v290, %v289
    %v302 = vpack.c.b16 %v292, %v291
    %v303 = vpack.c.b16 %v294, %v293
    %v304 = vpack.c.b16 %v296, %v295
    %313 = vmatprep.subr.bf16.mxu0 0
    %314 = vmatpush1.bf16.msra.mxu0 %v304
    %315 = vmatprep.subr.bf16.mxu0 0
    %316 = vmatpush1.bf16.msra.mxu0 %v303
    %317 = vmatprep.subr.bf16.mxu0 0
    %318 = vmatpush1.bf16.msra.mxu0 %v302
    %319 = vmatprep.subr.bf16.mxu0 0
    %320 = vmatpush1.bf16.msra.mxu0 %v301
    %321 = vmatprep.subr.bf16.mxu0 0
    %322 = vmatpush1.bf16.msra.mxu0 %v300
    %323 = vmatprep.subr.bf16.mxu0 0
    %324 = vmatpush1.bf16.msra.mxu0 %v299
    %325 = vmatprep.subr.bf16.mxu0 0
    %326 = vmatpush1.bf16.msra.mxu0 %v298
    %327 = vmatprep.subr.bf16.mxu0 0
    %328 = vmatpush1.bf16.msra.mxu0 %v297
    %329 = vmatprep.subr.bf16.mxu0 0
    %330 = vmatpush2.bf16.msra.mxu0 0
    %331 = vmatprep.subr.bf16.mxu0 0
    %332 = vmatpush2.bf16.msra.mxu0 0
    %333 = vmatprep.subr.bf16.mxu0 0
    %334 = vmatpush2.bf16.msra.mxu0 0
    %335 = vmatprep.subr.bf16.mxu0 0
    %336 = vmatpush2.bf16.msra.mxu0 0
    %337 = vmatprep.subr.bf16.mxu0 0
    %338 = vmatpush2.bf16.msra.mxu0 0
    %339 = vmatprep.subr.bf16.mxu0 0
    %340 = vmatpush2.bf16.msra.mxu0 0
    %341 = vmatprep.subr.bf16.mxu0 0
    %342 = vmatpush2.bf16.msra.mxu0 0
    %343 = vmatprep.subr.bf16.mxu0 0
    %344 = vmatpush2.bf16.msra.mxu0 0
    %345 = vmatprep.mubr.bf16.mxu0 0
    %346 = vmatmul.mubr.bf16.gmra.mxu0 %v241
    %v347 = vpop.f32.mrf.mxu0
    %v348 = vadd.f32 %v263, %v347
    %v349 = vpop.f32.mrf.mxu0
    %v350 = vpop.f32.mrf.mxu0
    %v351 = vpop.f32.mrf.mxu0
    %352 = vdwg.mxu0
    %v353 = vmax.f32 %v348, 0.0
    %v354 = vpack.c.bf16 %v353, %v353
    %v355 = vld [vmem:[#allocation8] sm:$0xf]
    %v356 = vld [vmem:[#allocation8 + $0x4] sm:$0xf]
    %v357 = vld [vmem:[#allocation8 + $0x8] sm:$0xf]
    %v358 = vld [vmem:[#allocation8 + $0xc] sm:$0xf]
    %v359 = vld [vmem:[#allocation8 + $0x10] sm:$0xf]
    %v360 = vld [vmem:[#allocation8 + $0x14] sm:$0xf]
    %v361 = vld [vmem:[#allocation8 + $0x18] sm:$0xf]
    %v362 = vld [vmem:[#allocation8 + $0x1c] sm:$0xf]
    %v363 = vld [vmem:[#allocation8 + $0x20] sm:$0xf]
    %v364 = vld [vmem:[#allocation8 + $0x24] sm:$0xf]
    %v365 = vld [vmem:[#allocation8 + $0x28] sm:$0xf]
    %v366 = vld [vmem:[#allocation8 + $0x2c] sm:$0xf]
    %v367 = vld [vmem:[#allocation8 + $0x30] sm:$0xf]
    %v368 = vld [vmem:[#allocation8 + $0x34] sm:$0xf]
    %v369 = vld [vmem:[#allocation8 + $0x38] sm:$0xf]
    %v370 = vld [vmem:[#allocation8 + $0x3c] sm:$0xf]
    %v371 = vld [vmem:[%s6] sm:$0x1]
    %v373 = vlaneseq
    %v374 = vshrl.u32 %v373, 7
    %v375 = vsub.s32 0, %v374
    %v376 = vrot.slane %v371, %v375
    %v394 = vunpack.c.l.b16 %v355
    %v395 = vunpack.c.l.b16 %v356
    %v396 = vunpack.c.l.b16 %v357
    %v397 = vunpack.c.l.b16 %v358
    %v398 = vunpack.c.l.b16 %v359
    %v399 = vunpack.c.l.b16 %v360
    %v400 = vunpack.c.l.b16 %v361
    %v401 = vunpack.c.l.b16 %v362
    %v402 = vunpack.c.l.b16 %v363
    %v403 = vunpack.c.l.b16 %v364
    %v404 = vunpack.c.l.b16 %v365
    %v405 = vunpack.c.l.b16 %v366
    %v406 = vunpack.c.l.b16 %v367
    %v407 = vunpack.c.l.b16 %v368
    %v408 = vunpack.c.l.b16 %v369
    %v409 = vunpack.c.l.b16 %v370
    %v410 = vpack.c.b16 %v395, %v394
    %v411 = vpack.c.b16 %v397, %v396
    %v412 = vpack.c.b16 %v399, %v398
    %v413 = vpack.c.b16 %v401, %v400
    %v414 = vpack.c.b16 %v403, %v402
    %v415 = vpack.c.b16 %v405, %v404
    %v416 = vpack.c.b16 %v407, %v406
    %v417 = vpack.c.b16 %v409, %v408
    %426 = vmatprep.subr.bf16.mxu0 0
    %427 = vmatpush1.bf16.msra.mxu0 %v417
    %428 = vmatprep.subr.bf16.mxu0 0
    %429 = vmatpush1.bf16.msra.mxu0 %v416
    %430 = vmatprep.subr.bf16.mxu0 0
    %431 = vmatpush1.bf16.msra.mxu0 %v415
    %432 = vmatprep.subr.bf16.mxu0 0
    %433 = vmatpush1.bf16.msra.mxu0 %v414
    %434 = vmatprep.subr.bf16.mxu0 0
    %435 = vmatpush1.bf16.msra.mxu0 %v413
    %436 = vmatprep.subr.bf16.mxu0 0
    %437 = vmatpush1.bf16.msra.mxu0 %v412
    %438 = vmatprep.subr.bf16.mxu0 0
    %439 = vmatpush1.bf16.msra.mxu0 %v411
    %440 = vmatprep.subr.bf16.mxu0 0
    %441 = vmatpush1.bf16.msra.mxu0 %v410
    %442 = vmatprep.subr.bf16.mxu0 0
    %443 = vmatpush2.bf16.msra.mxu0 0
    %444 = vmatprep.subr.bf16.mxu0 0
    %445 = vmatpush2.bf16.msra.mxu0 0
    %446 = vmatprep.subr.bf16.mxu0 0
    %447 = vmatpush2.bf16.msra.mxu0 0
    %448 = vmatprep.subr.bf16.mxu0 0
    %449 = vmatpush2.bf16.msra.mxu0 0
    %450 = vmatprep.subr.bf16.mxu0 0
    %451 = vmatpush2.bf16.msra.mxu0 0
    %452 = vmatprep.subr.bf16.mxu0 0
    %453 = vmatpush2.bf16.msra.mxu0 0
    %454 = vmatprep.subr.bf16.mxu0 0
    %455 = vmatpush2.bf16.msra.mxu0 0
    %456 = vmatprep.subr.bf16.mxu0 0
    %457 = vmatpush2.bf16.msra.mxu0 0
    %458 = vmatprep.mubr.bf16.mxu0 0
    %459 = vmatmul.mubr.bf16.gmra.mxu0 %v354
    %v460 = vpop.f32.mrf.mxu0
    %v461 = vadd.f32 %v376, %v460
    %v462 = vpop.f32.mrf.mxu0
    %v463 = vpop.f32.mrf.mxu0
    %v464 = vpop.f32.mrf.mxu0
    %465 = vdwg.mxu0
    %466 = vst [vmem:[#allocation10] sm:$0xff] %v461
    // Predicated region
    $region46: #{net_forward.1} parent=1 // pred_check
      _
    $region47: #{net_forward.1} parent=1 // pred_check_branch
      %468 = sbr.rel (0) target = $region49
    $region48: #{net_forward.1} parent=1 // pred_region
      %s470 = ssub.s32 128, 128
      %471 = vsyncadd [#allocation4], %s470
      %s473 = sshll.u32 [#allocation10], 4
      %s474 = int_to_ptr.vmem [resolvable:$true] %s473
      %476 = dma.vmem_to_hbm [thread:$0]  %s474, 128, %s7, [#allocation4]
    $region49: #{net_forward.1} parent=1 // pred_fallthru
      _
    // Predicated region
    $region50: #{net_forward.1} parent=1 // pred_check
      _
    $region51: #{net_forward.1} parent=1 // pred_check_branch
      %478 = sbr.rel (0) target = $region53
    $region52: #{net_forward.1} parent=1 // pred_region
      %479 = dma.done [#allocation4], 128
    $region53: #{net_forward.1} parent=1 // pred_fallthru
      _
    %480 = vsyncpa [#allocation3], 1
    %481 = vsyncpa [#allocation6], 1
    %482 = vsyncpa [#allocation9], 1
    %483 = vsyncpa [#allocation4], 1

</llo_original>
